<compile_context>
chip_gen: v5e
topology: v5e:2x2
jax: 0.10.0
libtpu: 0.0.40
codegen_flags: <defaults>
</compile_context>

<pallas_src>
import jax
import jax.numpy as jnp
from jax.experimental import pallas as pl
from jax.experimental.pallas import tpu as pltpu

LANE = 128
SUBLANES = 8


def _wbce_kernel(n_ref, cw_ref, x_ref, t_ref, out_ref):
    """Weighted-BCE partial sums, accumulated into a resident (8,128) output block.

    n_ref   : SMEM (1,)   int32   number of valid (unpadded) elements
    cw_ref  : SMEM (1, 2) float32 class weights [w00, w01]
    x_ref   : VMEM (TM, 128) logits tile (native dtype)
    t_ref   : VMEM (TM, 128) targets tile (native dtype)
    out_ref : VMEM (8, 128)  float32 per-partition partial-sum accumulator
    """
    j = pl.program_id(1)

    @pl.when(j == 0)
    def _init():
        out_ref[...] = jnp.zeros_like(out_ref)

    tm, lane = x_ref.shape
    x = x_ref[...].astype(jnp.float32)
    t = t_ref[...].astype(jnp.float32)

    # In-kernel validity mask for the padded tail (no mask streamed from HBM).
    tile_idx = pl.program_id(0) * pl.num_programs(1) + j
    rem = n_ref[0] - tile_idx * (tm * lane)  # elements of this tile that are real
    local = (jax.lax.broadcasted_iota(jnp.int32, (tm, lane), 0) * lane
             + jax.lax.broadcasted_iota(jnp.int32, (tm, lane), 1))
    valid = local < rem

    p = jax.nn.sigmoid(x)
    w0 = cw_ref[0, 0]
    w1 = cw_ref[0, 1]
    loss = (w0 * (t * jnp.log(p + 0.0001))
            + w1 * ((1.0 - t) * jnp.log(1.0 - p + 0.0001)))
    loss = jnp.where(valid, loss, 0.0)

    # (TM,128) -> (8,128) via cheap vreg-wise adds (VPU); the expensive cross-lane
    # reduce happens exactly once, outside the kernel.
    out_ref[...] += loss.reshape(tm // SUBLANES, SUBLANES, lane).sum(axis=0)


def weighted_bce_loss_2d(logits, targets, classweights, *,
                         tile_rows=2048, num_partitions=2):
    """Pallas implementation of WeightedBCELoss2d.forward.

    logits, targets : arbitrary (matching) shapes, e.g. NCHW [N, C, H, W], any float dtype
    classweights    : shape (1, 2) — uses classweights[0, 0] and classweights[0, 1]
    returns         : scalar float32 loss
    """
    n = logits.size
    x = logits.reshape(-1)   # native dtype; cast happens in-kernel
    t = targets.reshape(-1)

    # Tile size: multiple of 8 sublanes, clamped to the actual data size.
    rows_needed = pl.cdiv(n, LANE)
    tm = min(int(tile_rows), pl.cdiv(rows_needed, SUBLANES) * SUBLANES)
    tm = max(SUBLANES, (tm // SUBLANES) * SUBLANES)

    block_elems = tm * LANE
    total_blocks = pl.cdiv(n, block_elems)
    parts = max(1, min(int(num_partitions), total_blocks))   # 2 -> both v7x TCs
    bpp = pl.cdiv(total_blocks, parts)                        # blocks per partition

    # Pad (zeros) only when the flat size is not already grid-aligned; padded
    # elements are zeroed by the in-kernel iota mask, so values are irrelevant.
    n_padded = parts * bpp * block_elems
    pad = n_padded - n
    if pad:
        x = jnp.pad(x, (0, pad))
        t = jnp.pad(t, (0, pad))

    rows = n_padded // LANE
    x2 = x.reshape(rows, LANE)
    t2 = t.reshape(rows, LANE)
    cw = classweights.astype(jnp.float32).reshape(1, 2)
    n_arr = jnp.array([n], dtype=jnp.int32)

    grid = (parts, bpp)

    partials = pl.pallas_call(
        _wbce_kernel,
        out_shape=jax.ShapeDtypeStruct((parts * SUBLANES, LANE), jnp.float32),
        grid_spec=pltpu.PrefetchScalarGridSpec(
            num_scalar_prefetch=0,
            grid=grid,
            in_specs=[
                pl.BlockSpec(memory_space=pltpu.MemorySpace.SMEM),      # n (scalar)
                pl.BlockSpec(memory_space=pltpu.MemorySpace.SMEM),      # classweights
                pl.BlockSpec((tm, LANE), lambda p, j: (p * bpp + j, 0)),  # logits tile
                pl.BlockSpec((tm, LANE), lambda p, j: (p * bpp + j, 0)),  # targets tile
            ],
            out_specs=pl.BlockSpec((SUBLANES, LANE), lambda p, j: (p, 0)),
        ),
        compiler_params=pltpu.CompilerParams(
            dimension_semantics=("parallel", "arbitrary")),
    )(n_arr, cw, x2, t2)

    # Single cross-lane reduce + negate of the tiny (parts*8, 128) partial block.
    return -jnp.sum(partials)


def _reference(logits, targets, classweights):
    p = jax.nn.sigmoid(logits.astype(jnp.float32)).reshape(-1)
    t = targets.astype(jnp.float32).reshape(-1)
    w0 = classweights[0, 0]
    w1 = classweights[0, 1]
    loss = w0 * (t * jnp.log(p + 0.0001)) + w1 * ((1.0 - t) * jnp.log(1.0 - p + 0.0001))
    return -jnp.sum(loss)


if __name__ == "__main__":
    key = jax.random.PRNGKey(0)
    k1, k2 = jax.random.split(key)

    # Small NCHW shapes: batch=2, channels=4, spatial=16x16 (2048 elements, 128-aligned)
    logits = jax.random.normal(k1, (2, 4, 16, 16), dtype=jnp.float32)
    targets = (jax.random.uniform(k2, (2, 4, 16, 16)) > 0.5).astype(jnp.float32)
    classweights = jnp.array([[0.7, 0.3]], dtype=jnp.float32)

    out = jax.block_until_ready(weighted_bce_loss_2d(logits, targets, classweights))
    ref = _reference(logits, targets, classweights)
    assert jnp.allclose(out, ref, rtol=1e-5, atol=1e-3), (out, ref)

    # Ragged, non-128-aligned case exercises the in-kernel tail mask (210 elements).
    k3, k4 = jax.random.split(k1)
    logits2 = jax.random.normal(k3, (2, 3, 7, 5), dtype=jnp.float32)
    targets2 = (jax.random.uniform(k4, (2, 3, 7, 5)) > 0.5).astype(jnp.float32)
    out2 = jax.block_until_ready(weighted_bce_loss_2d(logits2, targets2, classweights))
    ref2 = _reference(logits2, targets2, classweights)
    assert jnp.allclose(out2, ref2, rtol=1e-5, atol=1e-3), (out2, ref2)

    print("KERNEL_OK")
</pallas_src>

<mosaic_0001>
module attributes {stable_mosaic.version = 11 : i64} {
  func.func @_wbce_kernel(%arg0: i32, %arg1: i32, %arg2: memref<1xi32, #tpu.memory_space<smem>>, %arg3: memref<1x2xf32, #tpu.memory_space<smem>>, %arg4: memref<16x128xf32, #tpu.memory_space<vmem>>, %arg5: memref<16x128xf32, #tpu.memory_space<vmem>>, %arg6: memref<8x128xf32, #tpu.memory_space<vmem>>) attributes {dimension_semantics = [#tpu.dimension_semantics<parallel>, #tpu.dimension_semantics<arbitrary>], iteration_bounds = array<i64: 1, 1>, scalar_prefetch = 0 : i64, scratch_operands = 0 : i64, tpu.core_type = #tpu.core_type<tc>, window_params = [{transform_indices = @transform_0, window_bounds = array<i64: 1>}, {transform_indices = @transform_1, window_bounds = array<i64: 1, 2>}, {transform_indices = @transform_2, window_bounds = array<i64: 16, 128>}, {transform_indices = @transform_3, window_bounds = array<i64: 16, 128>}, {transform_indices = @transform_4, window_bounds = array<i64: 8, 128>}]} {
    %c0_i32 = arith.constant 0 : i32
    %0 = arith.cmpi eq, %arg1, %c0_i32 : i32
    %1 = arith.extui %0 : i1 to i32
    %c0_i32_0 = arith.constant 0 : i32
    %2 = arith.cmpi ne, %1, %c0_i32_0 : i32
    scf.if %2 {
      %cst_18 = arith.constant 0.000000e+00 : f32
      %48 = vector.broadcast %cst_18 : f32 to vector<8x128xf32>
      %c0_19 = arith.constant 0 : index
      %c0_20 = arith.constant 0 : index
      %49 = vector.load %arg6[%c0_19, %c0_20] : memref<8x128xf32, #tpu.memory_space<vmem>>, vector<8x128xf32>
      tpu.vector_store %arg6[%c0_19, %c0_20], %48 {strides = array<i32>} : memref<8x128xf32, #tpu.memory_space<vmem>>, vector<8x128xf32>,
    } else {
    }
    %c0 = arith.constant 0 : index
    %c0_1 = arith.constant 0 : index
    %3 = vector.load %arg4[%c0, %c0_1] : memref<16x128xf32, #tpu.memory_space<vmem>>, vector<16x128xf32>
    %c0_2 = arith.constant 0 : index
    %c0_3 = arith.constant 0 : index
    %4 = vector.load %arg5[%c0_2, %c0_3] : memref<16x128xf32, #tpu.memory_space<vmem>>, vector<16x128xf32>
    %c1_i32 = arith.constant 1 : i32
    %5 = arith.muli %arg0, %c1_i32 : i32
    %6 = arith.addi %5, %arg1 : i32
    %c0_4 = arith.constant 0 : index
    %7 = memref.load %arg2[%c0_4] : memref<1xi32, #tpu.memory_space<smem>>
    %c2048_i32 = arith.constant 2048 : i32
    %8 = arith.muli %6, %c2048_i32 : i32
    %9 = arith.subi %7, %8 : i32
    %10 = tpu.iota {dimensions = array<i32: 0>} : vector<16x128xi32>
    %c128_i32 = arith.constant 128 : i32
    %11 = vector.broadcast %c128_i32 : i32 to vector<16x128xi32>
    %12 = arith.muli %10, %11 : vector<16x128xi32>
    %13 = tpu.iota {dimensions = array<i32: 1>} : vector<16x128xi32>
    %14 = arith.addi %12, %13 : vector<16x128xi32>
    %15 = vector.broadcast %9 : i32 to vector<16x128xi32>
    %16 = arith.cmpi slt, %14, %15 : vector<16x128xi32>
    %17 = arith.negf %3 : vector<16x128xf32>
    %18 = math.exp %17 : vector<16x128xf32>
    %cst = arith.constant 1.000000e+00 : f32
    %19 = vector.broadcast %cst : f32 to vector<16x128xf32>
    %20 = arith.addf %19, %18 : vector<16x128xf32>
    %21 = arith.divf %19, %20 : vector<16x128xf32>
    %c0_5 = arith.constant 0 : index
    %c0_6 = arith.constant 0 : index
    %22 = memref.load %arg3[%c0_5, %c0_6] : memref<1x2xf32, #tpu.memory_space<smem>>
    %c0_7 = arith.constant 0 : index
    %c1 = arith.constant 1 : index
    %23 = memref.load %arg3[%c0_7, %c1] : memref<1x2xf32, #tpu.memory_space<smem>>
    %cst_8 = arith.constant 9.99999974E-5 : f32
    %24 = vector.broadcast %cst_8 : f32 to vector<16x128xf32>
    %25 = arith.addf %21, %24 : vector<16x128xf32>
    %26 = math.log %25 : vector<16x128xf32>
    %27 = arith.mulf %4, %26 : vector<16x128xf32>
    %28 = vector.broadcast %22 : f32 to vector<16x128xf32>
    %29 = arith.mulf %28, %27 : vector<16x128xf32>
    %cst_9 = arith.constant 1.000000e+00 : f32
    %30 = vector.broadcast %cst_9 : f32 to vector<16x128xf32>
    %31 = arith.subf %30, %4 : vector<16x128xf32>
    %cst_10 = arith.constant 1.000000e+00 : f32
    %32 = vector.broadcast %cst_10 : f32 to vector<16x128xf32>
    %33 = arith.subf %32, %21 : vector<16x128xf32>
    %cst_11 = arith.constant 9.99999974E-5 : f32
    %34 = vector.broadcast %cst_11 : f32 to vector<16x128xf32>
    %35 = arith.addf %33, %34 : vector<16x128xf32>
    %36 = math.log %35 : vector<16x128xf32>
    %37 = arith.mulf %31, %36 : vector<16x128xf32>
    %38 = vector.broadcast %23 : f32 to vector<16x128xf32>
    %39 = arith.mulf %38, %37 : vector<16x128xf32>
    %40 = arith.addf %29, %39 : vector<16x128xf32>
    %cst_12 = arith.constant 0.000000e+00 : f32
    %41 = vector.broadcast %cst_12 : f32 to vector<16x128xf32>
    %42 = arith.select %16, %40, %41 : vector<16x128xi1>, vector<16x128xf32>
    %c0_13 = arith.constant 0 : index
    %c0_14 = arith.constant 0 : index
    %43 = vector.load %arg6[%c0_13, %c0_14] : memref<8x128xf32, #tpu.memory_space<vmem>>, vector<8x128xf32>
    %44 = vector.shape_cast %42 : vector<16x128xf32> to vector<2x8x128xf32>
    %cst_15 = arith.constant dense<0.000000e+00> : vector<8x128xf32>
    %45 = vector.multi_reduction <add>, %44, %cst_15 [0] : vector<2x8x128xf32> to vector<8x128xf32>
    %46 = arith.addf %43, %45 : vector<8x128xf32>
    %c0_16 = arith.constant 0 : index
    %c0_17 = arith.constant 0 : index
    %47 = vector.load %arg6[%c0_16, %c0_17] : memref<8x128xf32, #tpu.memory_space<vmem>>, vector<8x128xf32>
    tpu.vector_store %arg6[%c0_16, %c0_17], %46 {strides = array<i32>} : memref<8x128xf32, #tpu.memory_space<vmem>>, vector<8x128xf32>,
    return
  }
  func.func @transform_0(%arg0: i32, %arg1: i32) -> i32 {
    %c0_i32 = arith.constant 0 : i32
    %c0_i32_0 = arith.constant 0 : i32
    return %c0_i32 : i32
  }
  func.func @transform_1(%arg0: i32, %arg1: i32) -> (i32, i32) {
    %c0_i32 = arith.constant 0 : i32
    %c0_i32_0 = arith.constant 0 : i32
    %c0_i32_1 = arith.constant 0 : i32
    return %c0_i32, %c0_i32_0 : i32, i32
  }
  func.func @transform_2(%arg0: i32, %arg1: i32) -> (i32, i32) {
    %c1_i32 = arith.constant 1 : i32
    %0 = arith.muli %arg0, %c1_i32 : i32
    %1 = arith.addi %0, %arg1 : i32
    %c0_i32 = arith.constant 0 : i32
    %c0_i32_0 = arith.constant 0 : i32
    return %1, %c0_i32 : i32, i32
  }
  func.func @transform_3(%arg0: i32, %arg1: i32) -> (i32, i32) {
    %c1_i32 = arith.constant 1 : i32
    %0 = arith.muli %arg0, %c1_i32 : i32
    %1 = arith.addi %0, %arg1 : i32
    %c0_i32 = arith.constant 0 : i32
    %c0_i32_0 = arith.constant 0 : i32
    return %1, %c0_i32 : i32, i32
  }
  func.func @transform_4(%arg0: i32, %arg1: i32) -> (i32, i32) {
    %c0_i32 = arith.constant 0 : i32
    %c0_i32_0 = arith.constant 0 : i32
    return %arg0, %c0_i32 : i32, i32
  }
}

</mosaic_0001>

<llo_original>
// kernel: tpu_custom_call.1
$region0: #{tpu_custom_call.1}
  #allocation0 [shape = 'u32[]', space=smem, size = 0x4, offset = 0x4, fixed_abs, tag = 'smem constant byte address 0x4 - core index']
  #allocation1 [shape = 'u32[72,128]{1,0:T(1,128)}', space=vmem, size = 0x9000, scoped, tag = 'internal scratch']
  #allocation2 [shape = 's32[1]{0:T(128)S(6)}', space=smem, size = 0x200, scoped, tag = 'scoped memory for tpu_custom_call.1']
  %s0 = inlined_call_operand.<no memory space> [shape: s32[1], index: 0, kind: input, shape index: {}]
  %s1 = inlined_call_operand.vmem [shape: f32[1,2], index: 1, kind: input, shape index: {}]
  %s2 = inlined_call_operand.hbm [shape: f32[16,128], index: 2, kind: input, shape index: {}]
  %s3 = inlined_call_operand.hbm [shape: f32[16,128], index: 3, kind: input, shape index: {}]
  %s4 = inlined_call_operand.hbm [shape: f32[8,128], index: 4, kind: output, shape index: {}]
  %s5 = sld [smem:[#allocation0]]
  $region42: #{tpu_custom_call.1} parent=0
    _
  %s7 = ssub.s32 1, %s5
  %s8 = scalar_select 0, %s7, %s5
  %9 = sst [smem:[#allocation2]] %s0
  $region1: #{tpu_custom_call.1} parent=0
    #allocation3 [shape = 'u8[512]{0}', space=smem, size = 0x200, scoped, tag = 'input window, operand 1, single buffered']
    #allocation4 [shape = 's32[1]{0}', space=sflag, size = 0x4, scoped, tag = 'scoped memory for tpu_custom_call.1']
    #allocation5 [shape = 's32[1]{0}', space=sflag, size = 0x4, scoped, tag = 'scoped memory for tpu_custom_call.1']
    #allocation6 [shape = 's32[1]{0}', space=sflag, size = 0x4, scoped, tag = 'scoped memory for tpu_custom_call.1']
    #allocation7 [shape = 'u8[8192]{0}', space=vmem, size = 0x2000, scoped, tag = 'input window, operand 2, single buffered']
    #allocation8 [shape = 'u8[8192]{0}', space=vmem, size = 0x2000, scoped, tag = 'input window, operand 3, single buffered']
    #allocation9 [shape = 's32[1]{0}', space=sflag, size = 0x4, scoped, tag = 'scoped memory for tpu_custom_call.1']
    #allocation10 [shape = 'u8[4096]{0}', space=vmem, size = 0x1000, scoped, tag = 'output window, operand 0, single buffered']
    %10 = vsyncpa [#allocation6], 0
    %11 = vsyncpa [#allocation4], 0
    %12 = vsyncpa [#allocation9], 0
    %13 = vsyncpa [#allocation5], 0
    // Predicated region
    $region2: #{tpu_custom_call.1} parent=1 // pred_check
      _
    $region3: #{tpu_custom_call.1} parent=1 // pred_check_branch
      %15 = sbr.rel (0) target = $region5
    $region4: #{tpu_custom_call.1} parent=1 // pred_region
      _
    $region5: #{tpu_custom_call.1} parent=1 // pred_fallthru
      _
    // Predicated region
    $region6: #{tpu_custom_call.1} parent=1 // pred_check
      _
    $region7: #{tpu_custom_call.1} parent=1 // pred_check_branch
      %17 = sbr.rel (0) target = $region9
    $region8: #{tpu_custom_call.1} parent=1 // pred_region
      %19 = vsyncadd [#allocation6], 0
      %s21 = sshll.u32 %s1, 4
      %s22 = int_to_ptr.vmem [resolvable:$true] %s21
      %24 = dma.vmem_to_smem %s22, 16, [#allocation3], [#allocation6]
    $region9: #{tpu_custom_call.1} parent=1 // pred_fallthru
      _
    // Predicated region
    $region10: #{tpu_custom_call.1} parent=1 // pred_check
      _
    $region11: #{tpu_custom_call.1} parent=1 // pred_check_branch
      %26 = sbr.rel (0) target = $region13
    $region12: #{tpu_custom_call.1} parent=1 // pred_region
      %s27 = sadd.s32 0, 0
      %s28 = smul.u32 2, %s27
      %30 = vsyncadd [#allocation4], 0
      %s31 = smul.addr %s28, 8
      %s32 = scalar_lea.hbm %s2, %s31
      %s33 = sshll.u32 %s32, 4
      %s34 = int_to_ptr.hbm [resolvable:$true] %s33
      %s35 = sshll.u32 [#allocation7], 4
      %s36 = int_to_ptr.vmem [resolvable:$true] %s35
      %41 = dma.hbm_to_vmem [thread:$0]  %s34, 256, %s36, [#allocation4], 128, 128, 8
    $region13: #{tpu_custom_call.1} parent=1 // pred_fallthru
      _
    // Predicated region
    $region14: #{tpu_custom_call.1} parent=1 // pred_check
      _
    $region15: #{tpu_custom_call.1} parent=1 // pred_check_branch
      %43 = sbr.rel (0) target = $region17
    $region16: #{tpu_custom_call.1} parent=1 // pred_region
      %s44 = sadd.s32 0, 0
      %s45 = smul.u32 2, %s44
      %47 = vsyncadd [#allocation9], 0
      %s48 = smul.addr %s45, 8
      %s49 = scalar_lea.hbm %s3, %s48
      %s50 = sshll.u32 %s49, 4
      %s51 = int_to_ptr.hbm [resolvable:$true] %s50
      %s52 = sshll.u32 [#allocation8], 4
      %s53 = int_to_ptr.vmem [resolvable:$true] %s52
      %58 = dma.hbm_to_vmem [thread:$0]  %s51, 256, %s53, [#allocation9], 128, 128, 8
    $region17: #{tpu_custom_call.1} parent=1 // pred_fallthru
      _
    // Predicated region
    $region18: #{tpu_custom_call.1} parent=1 // pred_check
      _
    $region19: #{tpu_custom_call.1} parent=1 // pred_check_branch
      %60 = sbr.rel (0) target = $region21
    $region20: #{tpu_custom_call.1} parent=1 // pred_region
      %62 = dma.done [#allocation6], 16
    $region21: #{tpu_custom_call.1} parent=1 // pred_fallthru
      _
    // Predicated region
    $region22: #{tpu_custom_call.1} parent=1 // pred_check
      _
    $region23: #{tpu_custom_call.1} parent=1 // pred_check_branch
      %64 = sbr.rel (0) target = $region25
    $region24: #{tpu_custom_call.1} parent=1 // pred_region
      %66 = dma.done [#allocation4], 256
    $region25: #{tpu_custom_call.1} parent=1 // pred_fallthru
      _
    // Predicated region
    $region26: #{tpu_custom_call.1} parent=1 // pred_check
      _
    $region27: #{tpu_custom_call.1} parent=1 // pred_check_branch
      %68 = sbr.rel (0) target = $region29
    $region28: #{tpu_custom_call.1} parent=1 // pred_region
      %70 = dma.done [#allocation9], 256
    $region29: #{tpu_custom_call.1} parent=1 // pred_fallthru
      _
    %71 = sfence
    %s72 = sadd.s32 0, 0
    %s73 = smul.u32 2, %s72
    %s74 = sadd.s32 0, 0
    %s75 = smul.u32 2, %s74
    %p76 = scmp.eq.s32.totalorder 0, 0
    // Predicated region
    $region30: #{tpu_custom_call.1} parent=1 // pred_check
      %p77 = pneg %p76
    $region31: #{tpu_custom_call.1} parent=1 // pred_check_branch
      %79 = sbr.rel (%p77) target = $region33
    $region32: #{tpu_custom_call.1} parent=1 // pred_region
      %80 = vst [vmem:[#allocation10] sm:$0xff] 0.0
    $region33: #{tpu_custom_call.1} parent=1 // pred_fallthru
      _
    %v81 = vld [vmem:[#allocation7] sm:$0xff]
    %v82 = vld [vmem:[#allocation7 + $0x8] sm:$0xff]
    %v83 = vld [vmem:[#allocation8] sm:$0xff]
    %v84 = vld [vmem:[#allocation8 + $0x8] sm:$0xff]
    %s85 = sadd.s32 0, 0
    %s86 = sld [smem:[#allocation2]]
    %s87 = smul.u32 %s85, 2048
    %s88 = ssub.s32 %s86, %s87
    %v89 = vlaneseq
    %v90 = vshrl.u32 %v89, 7
    %v91 = vadd.s32 %v90, 8
    %v92 = vmul.u32 %v90, 128
    %v93 = vmul.u32 %v91, 128
    %v94 = vlaneseq
    %v95 = vand.u32 %v94, 127
    %v96 = vadd.s32 %v92, %v95
    %v97 = vadd.s32 %v93, %v95
    %v98 = vstv %s88
    %vm99 = vcmp.lt.s32.totalorder %v96, %v98
    %vm100 = vcmp.lt.s32.totalorder %v97, %v98
    %v101 = vxor.u32 %v81, 2147483648
    %v102 = vxor.u32 %v82, 2147483648
    %v103 = vmul.f32 %v101, 1.442695
    %v104 = vpow.pop %v103
    %v105 = vmul.f32 %v102, 1.442695
    %v106 = vpow.pop %v105
    %v107 = vadd.f32 %v104, 1.0
    %v108 = vadd.f32 %v106, 1.0
    %v109 = vrcp.pop %v107
    %v110 = vmul.f32 %v107, %v109
    %v111 = vsub.f32 1.0, %v110
    %v112 = vmul.f32 %v109, %v111
    %v113 = vadd.f32 %v109, %v112
    %vm114 = vweird.f32 %v107
    %vm115 = vweird.f32 %v109
    %vm116 = vmor %vm114, %vm115
    %v117 = vsel %vm116, %v109, %v113
    %v118 = vand.u32 2147483647, %v107
    %vm119 = vcmp.eq.f32.partialorder %v118, 8.507059e+37
    %v120 = vand.u32 %v107, 2147483648
    %v121 = vor.u32 1.1754944e-38, %v120
    %v122 = vsel %vm119, %v121, %v117
    %v123 = vmul.f32 1.0, %v122
    %v124 = vrcp.pop %v108
    %v125 = vmul.f32 %v108, %v124
    %v126 = vsub.f32 1.0, %v125
    %v127 = vmul.f32 %v124, %v126
    %v128 = vadd.f32 %v124, %v127
    %vm129 = vweird.f32 %v108
    %vm130 = vweird.f32 %v124
    %vm131 = vmor %vm129, %vm130
    %v132 = vsel %vm131, %v124, %v128
    %v133 = vand.u32 2147483647, %v108
    %vm134 = vcmp.eq.f32.partialorder %v133, 8.507059e+37
    %v135 = vand.u32 %v108, 2147483648
    %v136 = vor.u32 1.1754944e-38, %v135
    %v137 = vsel %vm134, %v136, %v132
    %v138 = vmul.f32 1.0, %v137
    %s139 = sld [smem:[#allocation3]]
    %s140 = sld [smem:[#allocation3 + $0x1]]
    %v141 = vadd.f32 %v123, 0.0001
    %v142 = vadd.f32 %v138, 0.0001
    %v143 = vlog2.pop %v141
    %v144 = vmul.f32 %v143, 0.6931472
    %v145 = vlog2.pop %v142
    %v146 = vmul.f32 %v145, 0.6931472
    %v147 = vmul.f32 %v83, %v144
    %v148 = vmul.f32 %v84, %v146
    %v149 = vstv %s139
    %v150 = vmul.f32 %v149, %v147
    %v151 = vmul.f32 %v149, %v148
    %v152 = vsub.f32 1.0, %v83
    %v153 = vsub.f32 1.0, %v84
    %v154 = vsub.f32 1.0, %v123
    %v155 = vsub.f32 1.0, %v138
    %v156 = vadd.f32 %v154, 0.0001
    %v157 = vadd.f32 %v155, 0.0001
    %v158 = vlog2.pop %v156
    %v159 = vmul.f32 %v158, 0.6931472
    %v160 = vlog2.pop %v157
    %v161 = vmul.f32 %v160, 0.6931472
    %v162 = vmul.f32 %v152, %v159
    %v163 = vmul.f32 %v153, %v161
    %v164 = vstv %s140
    %v165 = vmul.f32 %v164, %v162
    %v166 = vmul.f32 %v164, %v163
    %v167 = vadd.f32 %v150, %v165
    %v168 = vadd.f32 %v151, %v166
    %v169 = vsel %vm99, %v167, 0.0
    %v170 = vsel %vm100, %v168, 0.0
    %v171 = vld [vmem:[#allocation10] sm:$0xff]
    %v172 = vadd.f32 %v169, %v170
    %v173 = vadd.f32 %v171, %v172
    %174 = vst [vmem:[#allocation10] sm:$0xff] %v173
    // Predicated region
    $region34: #{tpu_custom_call.1} parent=1 // pred_check
      _
    $region35: #{tpu_custom_call.1} parent=1 // pred_check_branch
      %176 = sbr.rel (0) target = $region37
    $region36: #{tpu_custom_call.1} parent=1 // pred_region
      %178 = vsyncadd [#allocation5], 0
      %s180 = sshll.u32 [#allocation10], 4
      %s181 = int_to_ptr.vmem [resolvable:$true] %s180
      %s182 = sshll.u32 %s4, 4
      %s183 = int_to_ptr.hbm [resolvable:$true] %s182
      %185 = dma.vmem_to_hbm [thread:$0]  %s181, 128, %s183, [#allocation5]
    $region37: #{tpu_custom_call.1} parent=1 // pred_fallthru
      _
    // Predicated region
    $region38: #{tpu_custom_call.1} parent=1 // pred_check
      _
    $region39: #{tpu_custom_call.1} parent=1 // pred_check_branch
      %187 = sbr.rel (0) target = $region41
    $region40: #{tpu_custom_call.1} parent=1 // pred_region
      %189 = dma.done [#allocation5], 128
    $region41: #{tpu_custom_call.1} parent=1 // pred_fallthru
      _
    %190 = vsyncpa [#allocation4], 1
    %191 = vsyncpa [#allocation9], 1
    %192 = vsyncpa [#allocation5], 1
    %193 = vsyncpa [#allocation6], 1

</llo_original>
